<compile_context>
chip_gen: v6e
topology: v6e:2x2x1
jax: 0.10.0
libtpu: 0.0.40
codegen_flags: <defaults>
</compile_context>

<pallas_src>
import math
import functools

import jax
import jax.numpy as jnp
from jax.experimental import pallas as pl
from jax.experimental.pallas import tpu as pltpu

LANE = 128  # TPU lane width
NUM_HEADS = 1
NUM_PROJ = 3


def _attn_kernel(*refs, has_mask):
    if has_mask:
        x_ref, m_ref, wv_ref, mask_ref, o_ref = refs
    else:
        x_ref, m_ref, wv_ref, o_ref = refs
        mask_ref = None

    Bt, S, D = x_ref.shape
    x = x_ref[...]                                     # (Bt, S, D) f32
    x2 = x.reshape(Bt * S, D)                          # flatten batch for MXU fill

    # Scores via the folded matrix M = Wq * (1/sqrt(D)) @ Wk^T (no q/k tensors).
    xm = jnp.dot(x2, m_ref[...],
                 preferred_element_type=jnp.float32).reshape(Bt, S, D)
    s = jnp.einsum('bqd,bkd->bqk', xm, x,
                   preferred_element_type=jnp.float32)  # (Bt, S, S)

    # Numerically stable softmax with deferred normalization.
    mx = jnp.max(s, axis=-1, keepdims=True)
    e = jnp.exp(s - mx)                                 # unnormalized probs
    denom = jnp.sum(e, axis=-1, keepdims=True)          # (Bt, S, 1) pre-dropout

    if has_mask:
        # mask = keep / (1 - p); applying it to the unnormalized e with the
        # pre-dropout denominator equals dropout(softmax(s)).
        e = e * mask_ref[...]

    # Deferred V projection (zero-padded columns contribute 0 to the result).
    v = jnp.dot(x2, wv_ref[...],
                preferred_element_type=jnp.float32).reshape(Bt, S, LANE)
    out = jnp.einsum('bqk,bkl->bql', e, v,
                     preferred_element_type=jnp.float32)  # (Bt, S, LANE)

    inv = 1.0 / denom                                   # (Bt, S, 1), exact
    o_ref[...] = (out * inv).astype(o_ref.dtype)        # lane-dense store


def prepare_weights(query, key, value):
    """Fold + pad the static weights once (hoisted out of the forward path).

    query/key/value: (H, D, P). Returns (m_mat (D, D), wv_pad (D, LANE), P).
    """
    H, D, P = query.shape
    assert H == NUM_HEADS, "module semantics require H == 1"
    scale = 1.0 / math.sqrt(float(D))  # sqrt(input_shape[0]) fidelity choice
    m_mat = (query[0] * scale) @ key[0].T                   # (D, D)
    wv_pad = jnp.pad(value[0], ((0, 0), (0, LANE - P)))     # (D, LANE), zeros
    return m_mat, wv_pad, P


def _pick_bt(B):
    """Batch-block size: amortize per-step overhead, keep >= 2 grid steps."""
    if B <= 1:
        return 1
    for bt in (8, 4, 2, 1):
        if B % bt == 0 and B // bt >= 2:
            return bt
    return 1


def model_forward(x1, m_mat, wv_pad, num_proj, dropout_p, rng_key=None):
    """x1: (B, S, D); m_mat: (D, D); wv_pad: (D, LANE).

    Returns (H, P, S) for B == 1 (matching the module), (B, H, P, S) otherwise.
    """
    B, S, D = x1.shape
    dropout_p = float(dropout_p)
    out_shape = (NUM_HEADS, num_proj, S) if B == 1 else (B, NUM_HEADS, num_proj, S)

    # F.dropout(p=1) zeroes everything: skip the kernel entirely.
    if dropout_p >= 1.0:
        return jnp.zeros(out_shape, dtype=jnp.float32)

    bt = _pick_bt(B)
    grid = (B // bt,)
    has_mask = 0.0 < dropout_p < 1.0

    in_specs = [
        pl.BlockSpec((bt, S, D), lambda b: (b, 0, 0)),
        pl.BlockSpec((D, D), lambda b: (0, 0)),        # weights stay resident
        pl.BlockSpec((D, LANE), lambda b: (0, 0)),
    ]
    args = [x1, m_mat, wv_pad]

    if has_mask:
        if rng_key is None:
            rng_key = jax.random.PRNGKey(0)
        keep = jax.random.bernoulli(rng_key, 1.0 - dropout_p, (B, S, S))
        mask = keep.astype(jnp.float32) * (1.0 / (1.0 - dropout_p))
        in_specs.append(pl.BlockSpec((bt, S, S), lambda b: (b, 0, 0)))
        args.append(mask)

    kernel = functools.partial(_attn_kernel, has_mask=has_mask)

    out_pad = pl.pallas_call(
        kernel,
        grid=grid,
        in_specs=in_specs,
        out_specs=pl.BlockSpec((bt, S, LANE), lambda b: (b, 0, 0)),
        out_shape=jax.ShapeDtypeStruct((B, S, LANE), jnp.float32),
        compiler_params=pltpu.CompilerParams(
            dimension_semantics=("parallel",)),
    )(*args)

    out = out_pad[:, :, :num_proj].transpose(0, 2, 1)    # (B, P, S)
    if B == 1:
        return out.reshape(NUM_HEADS, num_proj, S)
    # TODO(synk): B > 1 cannot execute in the original PyTorch module (broken
    # view/matmul); we return per-batch attention outputs stacked as (B,H,P,S).
    return out.reshape(B, NUM_HEADS, num_proj, S)


if __name__ == "__main__":
    # Small shapes consistent with the module: H=1 head, P=3 projections,
    # seq S=128, feature D=32 (input_shape = (D,)), batch B=1.
    B, S, D, H, P = 1, 128, 32, 1, 3

    root = jax.random.PRNGKey(0)
    k1, k2, k3, k4 = jax.random.split(root, 4)
    x1 = jax.random.normal(k1, (B, S, D), dtype=jnp.float32)
    query = jax.random.normal(k2, (H, D, P), dtype=jnp.float32)
    key_p = jax.random.normal(k3, (H, D, P), dtype=jnp.float32)
    value = jax.random.normal(k4, (H, D, P), dtype=jnp.float32)

    m_mat, wv_pad, P_out = prepare_weights(query, key_p, value)

    # Pure-JAX reference pieces.
    q_ref = x1[0] @ query[0]
    k_ref = x1[0] @ key_p[0]
    v_ref = x1[0] @ value[0]
    s_ref = (q_ref @ k_ref.T) / jnp.sqrt(jnp.float32(D))
    sm_ref = jax.nn.softmax(s_ref, axis=-1)

    # Original test configuration: dropout_p = 1 -> all-zero output (short-circuit).
    out1 = jax.block_until_ready(
        model_forward(x1, m_mat, wv_pad, P_out, dropout_p=1.0))
    assert out1.shape == (H, P, S) and not bool(jnp.any(out1))

    # Kernel path with dropout disabled, checked against the pure-JAX reference.
    out0 = jax.block_until_ready(
        model_forward(x1, m_mat, wv_pad, P_out, dropout_p=0.0))
    ref0 = (sm_ref @ v_ref).T[None]
    assert out0.shape == (H, P, S)
    assert jnp.allclose(out0, ref0, rtol=1e-2, atol=1e-2)

    # Dropout path (0 < p < 1): mask generated in the wrapper from the same key.
    drop_key = jax.random.PRNGKey(123)
    outd = jax.block_until_ready(
        model_forward(x1, m_mat, wv_pad, P_out, dropout_p=0.5, rng_key=drop_key))
    keep = jax.random.bernoulli(drop_key, 0.5, (B, S, S)).astype(jnp.float32) / 0.5
    refd = ((sm_ref * keep[0]) @ v_ref).T[None]
    assert outd.shape == (H, P, S)
    assert jnp.allclose(outd, refd, rtol=1e-2, atol=1e-2)
    assert bool(jnp.all(jnp.isfinite(outd)))

    # Batched path (grid over batch blocks, "parallel" dimension semantics).
    Bn = 2
    x1b = jax.random.normal(jax.random.PRNGKey(7), (Bn, S, D), dtype=jnp.float32)
    outb = jax.block_until_ready(
        model_forward(x1b, m_mat, wv_pad, P_out, dropout_p=0.0))
    assert outb.shape == (Bn, H, P, S)
    for b in range(Bn):
        qb = x1b[b] @ query[0]
        kb = x1b[b] @ key_p[0]
        vb = x1b[b] @ value[0]
        sb = (qb @ kb.T) / jnp.sqrt(jnp.float32(D))
        rb = (jax.nn.softmax(sb, axis=-1) @ vb).T
        assert jnp.allclose(outb[b, 0], rb, rtol=1e-2, atol=1e-2)

    print("KERNEL_OK")
</pallas_src>

<mosaic_0001>
module attributes {stable_mosaic.version = 11 : i64} {
  func.func @_attn_kernel(%arg0: i32, %arg1: memref<1x128x32xf32, #tpu.memory_space<vmem>>, %arg2: memref<32x32xf32, #tpu.memory_space<vmem>>, %arg3: memref<32x128xf32, #tpu.memory_space<vmem>>, %arg4: memref<1x128x128xf32, #tpu.memory_space<vmem>>) attributes {dimension_semantics = [#tpu.dimension_semantics<parallel>], iteration_bounds = array<i64: 1>, scalar_prefetch = 0 : i64, scratch_operands = 0 : i64, tpu.core_type = #tpu.core_type<tc>, window_params = [{transform_indices = @transform_0, window_bounds = array<i64: 1, 128, 32>}, {pipeline_mode = #tpu.pipeline_mode<synchronous>, transform_indices = @transform_1, window_bounds = array<i64: 32, 32>}, {pipeline_mode = #tpu.pipeline_mode<synchronous>, transform_indices = @transform_2, window_bounds = array<i64: 32, 128>}, {transform_indices = @transform_3, window_bounds = array<i64: 1, 128, 128>}]} {
    %c0 = arith.constant 0 : index
    %c0_0 = arith.constant 0 : index
    %c0_1 = arith.constant 0 : index
    %0 = vector.load %arg1[%c0, %c0_0, %c0_1] : memref<1x128x32xf32, #tpu.memory_space<vmem>>, vector<1x128x32xf32>
    %1 = vector.shape_cast %0 : vector<1x128x32xf32> to vector<128x32xf32>
    %c0_2 = arith.constant 0 : index
    %c0_3 = arith.constant 0 : index
    %2 = vector.load %arg2[%c0_2, %c0_3] : memref<32x32xf32, #tpu.memory_space<vmem>>, vector<32x32xf32>
    %cst = arith.constant dense<0.000000e+00> : vector<128x32xf32>
    %3 = tpu.matmul %1, %2, %cst {dimension_numbers = #tpu.dot_dimension_numbers<[1], [0], [0], [1], [0, 0, 1, 1], [], []>} : vector<128x32xf32>, vector<32x32xf32>, vector<128x32xf32> -> vector<128x32xf32>
    %4 = vector.shape_cast %3 : vector<128x32xf32> to vector<1x128x32xf32>
    "tpu.trace_start"() <{level = 10 : i32, message = "bqd,bkd->bqk"}> : () -> ()
    %cst_4 = arith.constant dense<0.000000e+00> : vector<1x128x128xf32>
    %5 = tpu.matmul %4, %0, %cst_4 {dimension_numbers = #tpu.dot_dimension_numbers<[2], [2], [1], [1], [0, 0, 0, 1, 1, 1], [0], [0]>} : vector<1x128x32xf32>, vector<1x128x32xf32>, vector<1x128x128xf32> -> vector<1x128x128xf32>
    "tpu.trace_stop"() : () -> ()
    %cst_5 = arith.constant dense<0xFF800000> : vector<1x128xf32>
    %6 = vector.multi_reduction <maximumf>, %5, %cst_5 [2] : vector<1x128x128xf32> to vector<1x128xf32>
    %7 = vector.shape_cast %6 : vector<1x128xf32> to vector<1x128x1xf32>
    %8 = vector.broadcast %7 : vector<1x128x1xf32> to vector<1x128x128xf32>
    %9 = arith.subf %5, %8 : vector<1x128x128xf32>
    %10 = math.exp %9 : vector<1x128x128xf32>
    %cst_6 = arith.constant dense<0.000000e+00> : vector<1x128xf32>
    %11 = vector.multi_reduction <add>, %10, %cst_6 [2] : vector<1x128x128xf32> to vector<1x128xf32>
    %12 = vector.shape_cast %11 : vector<1x128xf32> to vector<1x128x1xf32>
    %c0_7 = arith.constant 0 : index
    %c0_8 = arith.constant 0 : index
    %13 = vector.load %arg3[%c0_7, %c0_8] : memref<32x128xf32, #tpu.memory_space<vmem>>, vector<32x128xf32>
    %cst_9 = arith.constant dense<0.000000e+00> : vector<128x128xf32>
    %14 = tpu.matmul %1, %13, %cst_9 {dimension_numbers = #tpu.dot_dimension_numbers<[1], [0], [0], [1], [0, 0, 1, 1], [], []>} : vector<128x32xf32>, vector<32x128xf32>, vector<128x128xf32> -> vector<128x128xf32>
    %15 = vector.shape_cast %14 : vector<128x128xf32> to vector<1x128x128xf32>
    "tpu.trace_start"() <{level = 10 : i32, message = "bqk,bkl->bql"}> : () -> ()
    %cst_10 = arith.constant dense<0.000000e+00> : vector<1x128x128xf32>
    %16 = tpu.matmul %10, %15, %cst_10 {dimension_numbers = #tpu.dot_dimension_numbers<[2], [1], [1], [2], [0, 0, 0, 1, 1, 2], [0], [0]>} : vector<1x128x128xf32>, vector<1x128x128xf32>, vector<1x128x128xf32> -> vector<1x128x128xf32>
    "tpu.trace_stop"() : () -> ()
    %cst_11 = arith.constant 1.000000e+00 : f32
    %17 = vector.broadcast %cst_11 : f32 to vector<1x128x1xf32>
    %18 = arith.divf %17, %12 : vector<1x128x1xf32>
    %19 = vector.broadcast %18 : vector<1x128x1xf32> to vector<1x128x128xf32>
    %20 = arith.mulf %16, %19 : vector<1x128x128xf32>
    %c0_12 = arith.constant 0 : index
    %c0_13 = arith.constant 0 : index
    %c0_14 = arith.constant 0 : index
    %21 = vector.load %arg4[%c0_12, %c0_13, %c0_14] : memref<1x128x128xf32, #tpu.memory_space<vmem>>, vector<1x128x128xf32>
    tpu.vector_store %arg4[%c0_12, %c0_13, %c0_14], %20 {strides = array<i32>} : memref<1x128x128xf32, #tpu.memory_space<vmem>>, vector<1x128x128xf32>,
    return
  }
  func.func @transform_0(%arg0: i32) -> (i32, i32, i32) {
    %c0_i32 = arith.constant 0 : i32
    %c0_i32_0 = arith.constant 0 : i32
    %c0_i32_1 = arith.constant 0 : i32
    return %arg0, %c0_i32, %c0_i32_0 : i32, i32, i32
  }
  func.func @transform_1(%arg0: i32) -> (i32, i32) {
    %c0_i32 = arith.constant 0 : i32
    %c0_i32_0 = arith.constant 0 : i32
    %c0_i32_1 = arith.constant 0 : i32
    return %c0_i32, %c0_i32_0 : i32, i32
  }
  func.func @transform_2(%arg0: i32) -> (i32, i32) {
    %c0_i32 = arith.constant 0 : i32
    %c0_i32_0 = arith.constant 0 : i32
    %c0_i32_1 = arith.constant 0 : i32
    return %c0_i32, %c0_i32_0 : i32, i32
  }
  func.func @transform_3(%arg0: i32) -> (i32, i32, i32) {
    %c0_i32 = arith.constant 0 : i32
    %c0_i32_0 = arith.constant 0 : i32
    %c0_i32_1 = arith.constant 0 : i32
    return %arg0, %c0_i32, %c0_i32_0 : i32, i32, i32
  }
}

</mosaic_0001>

<llo_original>
// kernel: tpu_custom_call.1
$region0: #{tpu_custom_call.1}
  #allocation0 [shape = 'u32[]', space=smem, size = 0x4, offset = 0x4, fixed_abs, tag = 'smem constant byte address 0x4 - core index']
  #allocation1 [shape = 'u32[144,128]{1,0:T(1,128)}', space=vmem, size = 0x12000, scoped, tag = 'internal scratch']
  %s0 = inlined_call_operand.vmem [shape: f32[1,128,32], index: 0, kind: input, shape index: {}]
  %s1 = inlined_call_operand.vmem [shape: f32[32,32], index: 1, kind: input, shape index: {}]
  %s2 = inlined_call_operand.vmem [shape: f32[32,128], index: 2, kind: input, shape index: {}]
  %s3 = inlined_call_operand.hbm [shape: f32[1,128,128], index: 3, kind: output, shape index: {}]
  %s4 = sld [smem:[#allocation0]]
  $region22: #{tpu_custom_call.1} parent=0
    _
  %s6 = ssub.s32 1, %s4
  %s7 = scalar_select 0, %s6, %s4
  $region1: #{tpu_custom_call.1} parent=0
    #allocation2 [shape = 'u8[65536]{0}', space=vmem, size = 0x10000, scoped, tag = 'output window, operand 0, single buffered']
    #allocation3 [shape = 's32[1]{0}', space=sflag, size = 0x4, scoped, tag = 'scoped memory for tpu_custom_call.1']
    %8 = vsyncpa [#allocation3], 0
    // Predicated region
    $region2: #{tpu_custom_call.1} parent=1 // pred_check
      _
    $region3: #{tpu_custom_call.1} parent=1 // pred_check_branch
      %10 = sbr.rel (0) target = $region5
    $region4: #{tpu_custom_call.1} parent=1 // pred_region
      _
    $region5: #{tpu_custom_call.1} parent=1 // pred_fallthru
      _
    // Predicated region
    $region6: #{tpu_custom_call.1} parent=1 // pred_check
      _
    $region7: #{tpu_custom_call.1} parent=1 // pred_check_branch
      %12 = sbr.rel (0) target = $region9
    $region8: #{tpu_custom_call.1} parent=1 // pred_region
      _
    $region9: #{tpu_custom_call.1} parent=1 // pred_fallthru
      _
    // Predicated region
    $region10: #{tpu_custom_call.1} parent=1 // pred_check
      _
    $region11: #{tpu_custom_call.1} parent=1 // pred_check_branch
      %14 = sbr.rel (0) target = $region13
    $region12: #{tpu_custom_call.1} parent=1 // pred_region
      _
    $region13: #{tpu_custom_call.1} parent=1 // pred_fallthru
      _
    %v15 = vld [vmem:[%s0] sm:$0xff]
    %v16 = vld [vmem:[%s0 + $0x8] sm:$0xff]
    %v17 = vld [vmem:[%s0 + $0x10] sm:$0xff]
    %v18 = vld [vmem:[%s0 + $0x18] sm:$0xff]
    %v19 = vld [vmem:[%s0 + $0x20] sm:$0xff]
    %v20 = vld [vmem:[%s0 + $0x28] sm:$0xff]
    %v21 = vld [vmem:[%s0 + $0x30] sm:$0xff]
    %v22 = vld [vmem:[%s0 + $0x38] sm:$0xff]
    %v23 = vld [vmem:[%s0 + $0x40] sm:$0xff]
    %v24 = vld [vmem:[%s0 + $0x48] sm:$0xff]
    %v25 = vld [vmem:[%s0 + $0x50] sm:$0xff]
    %v26 = vld [vmem:[%s0 + $0x58] sm:$0xff]
    %v27 = vld [vmem:[%s0 + $0x60] sm:$0xff]
    %v28 = vld [vmem:[%s0 + $0x68] sm:$0xff]
    %v29 = vld [vmem:[%s0 + $0x70] sm:$0xff]
    %v30 = vld [vmem:[%s0 + $0x78] sm:$0xff]
    %v31 = vld [vmem:[%s1] sm:$0xff]
    %v32 = vld [vmem:[%s1 + $0x8] sm:$0xff]
    %v33 = vld [vmem:[%s1 + $0x10] sm:$0xff]
    %v34 = vld [vmem:[%s1 + $0x18] sm:$0xff]
    %vm35 = vcmask 261120
    %v37 = vsel %vm35, %v15, 0
    %v40 = vsel %vm35, %v16, 0
    %v43 = vsel %vm35, %v17, 0
    %v46 = vsel %vm35, %v18, 0
    %v49 = vsel %vm35, %v19, 0
    %v52 = vsel %vm35, %v20, 0
    %v55 = vsel %vm35, %v21, 0
    %v58 = vsel %vm35, %v22, 0
    %v61 = vsel %vm35, %v23, 0
    %v64 = vsel %vm35, %v24, 0
    %v67 = vsel %vm35, %v25, 0
    %v70 = vsel %vm35, %v26, 0
    %v73 = vsel %vm35, %v27, 0
    %v76 = vsel %vm35, %v28, 0
    %v79 = vsel %vm35, %v29, 0
    %v82 = vsel %vm35, %v30, 0
    %84 = vmatprep.subr.mxu0 0.0
    %85 = vmatpush1.msra.mxu0 0.0
    %86 = vmatprep.subr.mxu0 0.0
    %87 = vmatpush1.msra.mxu0 0.0
    %88 = vmatprep.subr.mxu0 0.0
    %89 = vmatpush1.msra.mxu0 0.0
    %90 = vmatprep.subr.mxu0 0.0
    %91 = vmatpush1.msra.mxu0 0.0
    %92 = vmatprep.subr.mxu0 0.0
    %93 = vmatpush1.msra.mxu0 0.0
    %94 = vmatprep.subr.mxu0 0.0
    %95 = vmatpush1.msra.mxu0 0.0
    %96 = vmatprep.subr.mxu0 0.0
    %97 = vmatpush1.msra.mxu0 0.0
    %98 = vmatprep.subr.mxu0 0.0
    %99 = vmatpush1.msra.mxu0 0.0
    %100 = vmatprep.subr.mxu0 0.0
    %101 = vmatpush1.msra.mxu0 0.0
    %102 = vmatprep.subr.mxu0 0.0
    %103 = vmatpush1.msra.mxu0 0.0
    %104 = vmatprep.subr.mxu0 0.0
    %105 = vmatpush1.msra.mxu0 0.0
    %106 = vmatprep.subr.mxu0 0.0
    %107 = vmatpush1.msra.mxu0 0.0
    %108 = vmatprep.subr.mxu0 0.0
    %109 = vmatpush1.msra.mxu0 %v34
    %110 = vmatprep.subr.mxu0 0.0
    %111 = vmatpush1.msra.mxu0 %v33
    %112 = vmatprep.subr.mxu0 0.0
    %113 = vmatpush1.msra.mxu0 %v32
    %114 = vmatprep.subr.mxu0 0.0
    %115 = vmatpush1.msra.mxu0 %v31
    %116 = vmatprep.subr.mxu0 0.0
    %117 = vmatpush2.msra.mxu0 0.0
    %118 = vmatprep.subr.mxu0 0.0
    %119 = vmatpush2.msra.mxu0 0.0
    %120 = vmatprep.subr.mxu0 0.0
    %121 = vmatpush2.msra.mxu0 0.0
    %122 = vmatprep.subr.mxu0 0.0
    %123 = vmatpush2.msra.mxu0 0.0
    %124 = vmatprep.subr.mxu0 0.0
    %125 = vmatpush2.msra.mxu0 0.0
    %126 = vmatprep.subr.mxu0 0.0
    %127 = vmatpush2.msra.mxu0 0.0
    %128 = vmatprep.subr.mxu0 0.0
    %129 = vmatpush2.msra.mxu0 0.0
    %130 = vmatprep.subr.mxu0 0.0
    %131 = vmatpush2.msra.mxu0 0.0
    %132 = vmatprep.subr.mxu0 0.0
    %133 = vmatpush2.msra.mxu0 0.0
    %134 = vmatprep.subr.mxu0 0.0
    %135 = vmatpush2.msra.mxu0 0.0
    %136 = vmatprep.subr.mxu0 0.0
    %137 = vmatpush2.msra.mxu0 0.0
    %138 = vmatprep.subr.mxu0 0.0
    %139 = vmatpush2.msra.mxu0 0.0
    %140 = vmatprep.subr.mxu0 0.0
    %141 = vmatpush2.msra.mxu0 0.0
    %142 = vmatprep.subr.mxu0 0.0
    %143 = vmatpush2.msra.mxu0 0.0
    %144 = vmatprep.subr.mxu0 0.0
    %145 = vmatpush2.msra.mxu0 0.0
    %146 = vmatprep.subr.mxu0 0.0
    %147 = vmatpush2.msra.mxu0 0.0
    %148 = vmatprep.mubr.f32.mxu0 0.0
    %149 = vmatmul.mubr.f32.gmra.mxu0 %v37
    %v150 = vpop.f32.mrf.mxu0
    %v151 = vadd.f32 0.0, %v150
    %v152 = vpop.f32.mrf.mxu0
    %153 = vmatprep.mubr.f32.mxu0 0.0
    %154 = vmatmul.mubr.f32.gmra.mxu0 %v40
    %v155 = vpop.f32.mrf.mxu0
    %v156 = vadd.f32 0.0, %v155
    %v157 = vpop.f32.mrf.mxu0
    %158 = vmatprep.mubr.f32.mxu0 0.0
    %159 = vmatmul.mubr.f32.gmra.mxu0 %v43
    %v160 = vpop.f32.mrf.mxu0
    %v161 = vadd.f32 0.0, %v160
    %v162 = vpop.f32.mrf.mxu0
    %163 = vmatprep.mubr.f32.mxu0 0.0
    %164 = vmatmul.mubr.f32.gmra.mxu0 %v46
    %v165 = vpop.f32.mrf.mxu0
    %v166 = vadd.f32 0.0, %v165
    %v167 = vpop.f32.mrf.mxu0
    %168 = vmatprep.mubr.f32.mxu0 0.0
    %169 = vmatmul.mubr.f32.gmra.mxu0 %v49
    %v170 = vpop.f32.mrf.mxu0
    %v171 = vadd.f32 0.0, %v170
    %v172 = vpop.f32.mrf.mxu0
    %173 = vmatprep.mubr.f32.mxu0 0.0
    %174 = vmatmul.mubr.f32.gmra.mxu0 %v52
    %v175 = vpop.f32.mrf.mxu0
    %v176 = vadd.f32 0.0, %v175
    %v177 = vpop.f32.mrf.mxu0
    %178 = vmatprep.mubr.f32.mxu0 0.0
    %179 = vmatmul.mubr.f32.gmra.mxu0 %v55
    %v180 = vpop.f32.mrf.mxu0
    %v181 = vadd.f32 0.0, %v180
    %v182 = vpop.f32.mrf.mxu0
    %183 = vmatprep.mubr.f32.mxu0 0.0
    %184 = vmatmul.mubr.f32.gmra.mxu0 %v58
    %v185 = vpop.f32.mrf.mxu0
    %v186 = vadd.f32 0.0, %v185
    %v187 = vpop.f32.mrf.mxu0
    %188 = vmatprep.mubr.f32.mxu0 0.0
    %189 = vmatmul.mubr.f32.gmra.mxu0 %v61
    %v190 = vpop.f32.mrf.mxu0
    %v191 = vadd.f32 0.0, %v190
    %v192 = vpop.f32.mrf.mxu0
    %193 = vmatprep.mubr.f32.mxu0 0.0
    %194 = vmatmul.mubr.f32.gmra.mxu0 %v64
    %v195 = vpop.f32.mrf.mxu0
    %v196 = vadd.f32 0.0, %v195
    %v197 = vpop.f32.mrf.mxu0
    %198 = vmatprep.mubr.f32.mxu0 0.0
    %199 = vmatmul.mubr.f32.gmra.mxu0 %v67
    %v200 = vpop.f32.mrf.mxu0
    %v201 = vadd.f32 0.0, %v200
    %v202 = vpop.f32.mrf.mxu0
    %203 = vmatprep.mubr.f32.mxu0 0.0
    %204 = vmatmul.mubr.f32.gmra.mxu0 %v70
    %v205 = vpop.f32.mrf.mxu0
    %v206 = vadd.f32 0.0, %v205
    %v207 = vpop.f32.mrf.mxu0
    %208 = vmatprep.mubr.f32.mxu0 0.0
    %209 = vmatmul.mubr.f32.gmra.mxu0 %v73
    %v210 = vpop.f32.mrf.mxu0
    %v211 = vadd.f32 0.0, %v210
    %v212 = vpop.f32.mrf.mxu0
    %213 = vmatprep.mubr.f32.mxu0 0.0
    %214 = vmatmul.mubr.f32.gmra.mxu0 %v76
    %v215 = vpop.f32.mrf.mxu0
    %v216 = vadd.f32 0.0, %v215
    %v217 = vpop.f32.mrf.mxu0
    %218 = vmatprep.mubr.f32.mxu0 0.0
    %219 = vmatmul.mubr.f32.gmra.mxu0 %v79
    %v220 = vpop.f32.mrf.mxu0
    %v221 = vadd.f32 0.0, %v220
    %v222 = vpop.f32.mrf.mxu0
    %223 = vmatprep.mubr.f32.mxu0 0.0
    %224 = vmatmul.mubr.f32.gmra.mxu0 %v82
    %v225 = vpop.f32.mrf.mxu0
    %v226 = vadd.f32 0.0, %v225
    %v227 = vpop.f32.mrf.mxu0
    %228 = vdwg.mxu0
    %v230 = vsel %vm35, %v151, 0
    %v233 = vsel %vm35, %v156, 0
    %v236 = vsel %vm35, %v161, 0
    %v239 = vsel %vm35, %v166, 0
    %v242 = vsel %vm35, %v171, 0
    %v245 = vsel %vm35, %v176, 0
    %v248 = vsel %vm35, %v181, 0
    %v251 = vsel %vm35, %v186, 0
    %v254 = vsel %vm35, %v191, 0
    %v257 = vsel %vm35, %v196, 0
    %v260 = vsel %vm35, %v201, 0
    %v263 = vsel %vm35, %v206, 0
    %v266 = vsel %vm35, %v211, 0
    %v269 = vsel %vm35, %v216, 0
    %v272 = vsel %vm35, %v221, 0
    %v275 = vsel %vm35, %v226, 0
    %277 = vmatprep.subr.mxu0 0.0
    %278 = vmatpush1.xpose.msra.mxu0 %v82
    %279 = vmatprep.subr.mxu0 0.0
    %280 = vmatpush1.xpose.msra.mxu0 %v79
    %281 = vmatprep.subr.mxu0 0.0
    %282 = vmatpush1.xpose.msra.mxu0 %v76
    %283 = vmatprep.subr.mxu0 0.0
    %284 = vmatpush1.xpose.msra.mxu0 %v73
    %285 = vmatprep.subr.mxu0 0.0
    %286 = vmatpush1.xpose.msra.mxu0 %v70
    %287 = vmatprep.subr.mxu0 0.0
    %288 = vmatpush1.xpose.msra.mxu0 %v67
    %289 = vmatprep.subr.mxu0 0.0
    %290 = vmatpush1.xpose.msra.mxu0 %v64
    %291 = vmatprep.subr.mxu0 0.0
    %292 = vmatpush1.xpose.msra.mxu0 %v61
    %293 = vmatprep.subr.mxu0 0.0
    %294 = vmatpush1.xpose.msra.mxu0 %v58
    %295 = vmatprep.subr.mxu0 0.0
    %296 = vmatpush1.xpose.msra.mxu0 %v55
    %297 = vmatprep.subr.mxu0 0.0
    %298 = vmatpush1.xpose.msra.mxu0 %v52
    %299 = vmatprep.subr.mxu0 0.0
    %300 = vmatpush1.xpose.msra.mxu0 %v49
    %301 = vmatprep.subr.mxu0 0.0
    %302 = vmatpush1.xpose.msra.mxu0 %v46
    %303 = vmatprep.subr.mxu0 0.0
    %304 = vmatpush1.xpose.msra.mxu0 %v43
    %305 = vmatprep.subr.mxu0 0.0
    %306 = vmatpush1.xpose.msra.mxu0 %v40
    %307 = vmatprep.subr.mxu0 0.0
    %308 = vmatpush1.xpose.msra.mxu0 %v37
    %309 = vmatprep.subr.mxu0 0.0
    %310 = vmatpush2.xpose.msra.mxu0 0.0
    %311 = vmatprep.subr.mxu0 0.0
    %312 = vmatpush2.xpose.msra.mxu0 0.0
    %313 = vmatprep.subr.mxu0 0.0
    %314 = vmatpush2.xpose.msra.mxu0 0.0
    %315 = vmatprep.subr.mxu0 0.0
    %316 = vmatpush2.xpose.msra.mxu0 0.0
    %317 = vmatprep.subr.mxu0 0.0
    %318 = vmatpush2.xpose.msra.mxu0 0.0
    %319 = vmatprep.subr.mxu0 0.0
    %320 = vmatpush2.xpose.msra.mxu0 0.0
    %321 = vmatprep.subr.mxu0 0.0
    %322 = vmatpush2.xpose.msra.mxu0 0.0
    %323 = vmatprep.subr.mxu0 0.0
    %324 = vmatpush2.xpose.msra.mxu0 0.0
    %325 = vmatprep.subr.mxu0 0.0
    %326 = vmatpush2.xpose.msra.mxu0 0.0
    %327 = vmatprep.subr.mxu0 0.0
    %328 = vmatpush2.xpose.msra.mxu0 0.0
    %329 = vmatprep.subr.mxu0 0.0
    %330 = vmatpush2.xpose.msra.mxu0 0.0
    %331 = vmatprep.subr.mxu0 0.0
    %332 = vmatpush2.xpose.msra.mxu0 0.0
    %333 = vmatprep.subr.mxu0 0.0
    %334 = vmatpush2.xpose.msra.mxu0 0.0
    %335 = vmatprep.subr.mxu0 0.0
    %336 = vmatpush2.xpose.msra.mxu0 0.0
    %337 = vmatprep.subr.mxu0 0.0
    %338 = vmatpush2.xpose.msra.mxu0 0.0
    %339 = vmatprep.subr.mxu0 0.0
    %340 = vmatpush2.xpose.msra.mxu0 0.0
    %341 = vmatprep.mubr.f32.mxu0 0.0
    %342 = vmatmul.mubr.f32.gmra.mxu0 %v230
    %v343 = vpop.f32.mrf.mxu0
    %v344 = vadd.f32 0.0, %v343
    %v345 = vpop.f32.mrf.mxu0
    %346 = vmatprep.mubr.f32.mxu0 0.0
    %347 = vmatmul.mubr.f32.gmra.mxu0 %v233
    %v348 = vpop.f32.mrf.mxu0
    %v349 = vadd.f32 0.0, %v348
    %v350 = vpop.f32.mrf.mxu0
    %351 = vmatprep.mubr.f32.mxu0 0.0
    %352 = vmatmul.mubr.f32.gmra.mxu0 %v236
    %v353 = vpop.f32.mrf.mxu0
    %v354 = vadd.f32 0.0, %v353
    %v355 = vpop.f32.mrf.mxu0
    %356 = vmatprep.mubr.f32.mxu0 0.0
    %357 = vmatmul.mubr.f32.gmra.mxu0 %v239
    %v358 = vpop.f32.mrf.mxu0
    %v359 = vadd.f32 0.0, %v358
    %v360 = vpop.f32.mrf.mxu0
    %361 = vmatprep.mubr.f32.mxu0 0.0
    %362 = vmatmul.mubr.f32.gmra.mxu0 %v242
    %v363 = vpop.f32.mrf.mxu0
    %v364 = vadd.f32 0.0, %v363
    %v365 = vpop.f32.mrf.mxu0
    %366 = vmatprep.mubr.f32.mxu0 0.0
    %367 = vmatmul.mubr.f32.gmra.mxu0 %v245
    %v368 = vpop.f32.mrf.mxu0
    %v369 = vadd.f32 0.0, %v368
    %v370 = vpop.f32.mrf.mxu0
    %371 = vmatprep.mubr.f32.mxu0 0.0
    %372 = vmatmul.mubr.f32.gmra.mxu0 %v248
    %v373 = vpop.f32.mrf.mxu0
    %v374 = vadd.f32 0.0, %v373
    %v375 = vpop.f32.mrf.mxu0
    %376 = vmatprep.mubr.f32.mxu0 0.0
    %377 = vmatmul.mubr.f32.gmra.mxu0 %v251
    %v378 = vpop.f32.mrf.mxu0
    %v379 = vadd.f32 0.0, %v378
    %v380 = vpop.f32.mrf.mxu0
    %381 = vmatprep.mubr.f32.mxu0 0.0
    %382 = vmatmul.mubr.f32.gmra.mxu0 %v254
    %v383 = vpop.f32.mrf.mxu0
    %v384 = vadd.f32 0.0, %v383
    %v385 = vpop.f32.mrf.mxu0
    %386 = vmatprep.mubr.f32.mxu0 0.0
    %387 = vmatmul.mubr.f32.gmra.mxu0 %v257
    %v388 = vpop.f32.mrf.mxu0
    %v389 = vadd.f32 0.0, %v388
    %v390 = vpop.f32.mrf.mxu0
    %391 = vmatprep.mubr.f32.mxu0 0.0
    %392 = vmatmul.mubr.f32.gmra.mxu0 %v260
    %v393 = vpop.f32.mrf.mxu0
    %v394 = vadd.f32 0.0, %v393
    %v395 = vpop.f32.mrf.mxu0
    %396 = vmatprep.mubr.f32.mxu0 0.0
    %397 = vmatmul.mubr.f32.gmra.mxu0 %v263
    %v398 = vpop.f32.mrf.mxu0
    %v399 = vadd.f32 0.0, %v398
    %v400 = vpop.f32.mrf.mxu0
    %401 = vmatprep.mubr.f32.mxu0 0.0
    %402 = vmatmul.mubr.f32.gmra.mxu0 %v266
    %v403 = vpop.f32.mrf.mxu0
    %v404 = vadd.f32 0.0, %v403
    %v405 = vpop.f32.mrf.mxu0
    %406 = vmatprep.mubr.f32.mxu0 0.0
    %407 = vmatmul.mubr.f32.gmra.mxu0 %v269
    %v408 = vpop.f32.mrf.mxu0
    %v409 = vadd.f32 0.0, %v408
    %v410 = vpop.f32.mrf.mxu0
    %411 = vmatprep.mubr.f32.mxu0 0.0
    %412 = vmatmul.mubr.f32.gmra.mxu0 %v272
    %v413 = vpop.f32.mrf.mxu0
    %v414 = vadd.f32 0.0, %v413
    %v415 = vpop.f32.mrf.mxu0
    %416 = vmatprep.mubr.f32.mxu0 0.0
    %417 = vmatmul.mubr.f32.gmra.mxu0 %v275
    %v418 = vpop.f32.mrf.mxu0
    %v419 = vadd.f32 0.0, %v418
    %v420 = vpop.f32.mrf.mxu0
    %421 = vdwg.mxu0
    %422 = vmax.xlane.f32.xlu0 %v344
    %v423 = vpop.xlane.xlu0 %422
    %424 = vmax.xlane.f32.xlu0 %v349
    %v425 = vpop.xlane.xlu0 %424
    %426 = vmax.xlane.f32.xlu0 %v354
    %v427 = vpop.xlane.xlu0 %426
    %428 = vmax.xlane.f32.xlu0 %v359
    %v429 = vpop.xlane.xlu0 %428
    %430 = vmax.xlane.f32.xlu0 %v364
    %v431 = vpop.xlane.xlu0 %430
    %432 = vmax.xlane.f32.xlu0 %v369
    %v433 = vpop.xlane.xlu0 %432
    %434 = vmax.xlane.f32.xlu0 %v374
    %v435 = vpop.xlane.xlu0 %434
    %436 = vmax.xlane.f32.xlu0 %v379
    %v437 = vpop.xlane.xlu0 %436
    %438 = vmax.xlane.f32.xlu0 %v384
    %v439 = vpop.xlane.xlu0 %438
    %440 = vmax.xlane.f32.xlu0 %v389
    %v441 = vpop.xlane.xlu0 %440
    %442 = vmax.xlane.f32.xlu0 %v394
    %v443 = vpop.xlane.xlu0 %442
    %444 = vmax.xlane.f32.xlu0 %v399
    %v445 = vpop.xlane.xlu0 %444
    %446 = vmax.xlane.f32.xlu0 %v404
    %v447 = vpop.xlane.xlu0 %446
    %448 = vmax.xlane.f32.xlu0 %v409
    %v449 = vpop.xlane.xlu0 %448
    %450 = vmax.xlane.f32.xlu0 %v414
    %v451 = vpop.xlane.xlu0 %450
    %452 = vmax.xlane.f32.xlu0 %v419
    %v453 = vpop.xlane.xlu0 %452
    %v454 = vsub.f32 %v344, %v423
    %v455 = vsub.f32 %v349, %v425
    %v456 = vsub.f32 %v354, %v427
    %v457 = vsub.f32 %v359, %v429
    %v458 = vsub.f32 %v364, %v431
    %v459 = vsub.f32 %v369, %v433
    %v460 = vsub.f32 %v374, %v435
    %v461 = vsub.f32 %v379, %v437
    %v462 = vsub.f32 %v384, %v439
    %v463 = vsub.f32 %v389, %v441
    %v464 = vsub.f32 %v394, %v443
    %v465 = vsub.f32 %v399, %v445
    %v466 = vsub.f32 %v404, %v447
    %v467 = vsub.f32 %v409, %v449
    %v468 = vsub.f32 %v414, %v451
    %v469 = vsub.f32 %v419, %v453
    %v470 = vmul.f32 %v454, 1.442695
    %v471 = vpow.pop %v470
    %v472 = vmul.f32 %v455, 1.442695
    %v473 = vpow.pop %v472
    %v474 = vmul.f32 %v456, 1.442695
    %v475 = vpow.pop %v474
    %v476 = vmul.f32 %v457, 1.442695
    %v477 = vpow.pop %v476
    %v478 = vmul.f32 %v458, 1.442695
    %v479 = vpow.pop %v478
    %v480 = vmul.f32 %v459, 1.442695
    %v481 = vpow.pop %v480
    %v482 = vmul.f32 %v460, 1.442695
    %v483 = vpow.pop %v482
    %v484 = vmul.f32 %v461, 1.442695
    %v485 = vpow.pop %v484
    %v486 = vmul.f32 %v462, 1.442695
    %v487 = vpow.pop %v486
    %v488 = vmul.f32 %v463, 1.442695
    %v489 = vpow.pop %v488
    %v490 = vmul.f32 %v464, 1.442695
    %v491 = vpow.pop %v490
    %v492 = vmul.f32 %v465, 1.442695
    %v493 = vpow.pop %v492
    %v494 = vmul.f32 %v466, 1.442695
    %v495 = vpow.pop %v494
    %v496 = vmul.f32 %v467, 1.442695
    %v497 = vpow.pop %v496
    %v498 = vmul.f32 %v468, 1.442695
    %v499 = vpow.pop %v498
    %v500 = vmul.f32 %v469, 1.442695
    %v501 = vpow.pop %v500
    %502 = vadd.xlane.f32.xlu0 %v471
    %v503 = vpop.xlane.xlu0 %502
    %504 = vadd.xlane.f32.xlu0 %v473
    %v505 = vpop.xlane.xlu0 %504
    %506 = vadd.xlane.f32.xlu0 %v475
    %v507 = vpop.xlane.xlu0 %506
    %508 = vadd.xlane.f32.xlu0 %v477
    %v509 = vpop.xlane.xlu0 %508
    %510 = vadd.xlane.f32.xlu0 %v479
    %v511 = vpop.xlane.xlu0 %510
    %512 = vadd.xlane.f32.xlu0 %v481
    %v513 = vpop.xlane.xlu0 %512
    %514 = vadd.xlane.f32.xlu0 %v483
    %v515 = vpop.xlane.xlu0 %514
    %516 = vadd.xlane.f32.xlu0 %v485
    %v517 = vpop.xlane.xlu0 %516
    %518 = vadd.xlane.f32.xlu0 %v487
    %v519 = vpop.xlane.xlu0 %518
    %520 = vadd.xlane.f32.xlu0 %v489
    %v521 = vpop.xlane.xlu0 %520
    %522 = vadd.xlane.f32.xlu0 %v491
    %v523 = vpop.xlane.xlu0 %522
    %524 = vadd.xlane.f32.xlu0 %v493
    %v525 = vpop.xlane.xlu0 %524
    %526 = vadd.xlane.f32.xlu0 %v495
    %v527 = vpop.xlane.xlu0 %526
    %528 = vadd.xlane.f32.xlu0 %v497
    %v529 = vpop.xlane.xlu0 %528
    %530 = vadd.xlane.f32.xlu0 %v499
    %v531 = vpop.xlane.xlu0 %530
    %532 = vadd.xlane.f32.xlu0 %v501
    %v533 = vpop.xlane.xlu0 %532
    %v534 = vld [vmem:[%s2] sm:$0xff]
    %v535 = vld [vmem:[%s2 + $0x8] sm:$0xff]
    %v536 = vld [vmem:[%s2 + $0x10] sm:$0xff]
    %v537 = vld [vmem:[%s2 + $0x18] sm:$0xff]
    %538 = vmatprep.subr.mxu0 0.0
    %539 = vmatpush1.msra.mxu0 0.0
    %540 = vmatprep.subr.mxu0 0.0
    %541 = vmatpush1.msra.mxu0 0.0
    %542 = vmatprep.subr.mxu0 0.0
    %543 = vmatpush1.msra.mxu0 0.0
    %544 = vmatprep.subr.mxu0 0.0
    %545 = vmatpush1.msra.mxu0 0.0
    %546 = vmatprep.subr.mxu0 0.0
    %547 = vmatpush1.msra.mxu0 0.0
    %548 = vmatprep.subr.mxu0 0.0
    %549 = vmatpush1.msra.mxu0 0.0
    %550 = vmatprep.subr.mxu0 0.0
    %551 = vmatpush1.msra.mxu0 0.0
    %552 = vmatprep.subr.mxu0 0.0
    %553 = vmatpush1.msra.mxu0 0.0
    %554 = vmatprep.subr.mxu0 0.0
    %555 = vmatpush1.msra.mxu0 0.0
    %556 = vmatprep.subr.mxu0 0.0
    %557 = vmatpush1.msra.mxu0 0.0
    %558 = vmatprep.subr.mxu0 0.0
    %559 = vmatpush1.msra.mxu0 0.0
    %560 = vmatprep.subr.mxu0 0.0
    %561 = vmatpush1.msra.mxu0 0.0
    %562 = vmatprep.subr.mxu0 0.0
    %563 = vmatpush1.msra.mxu0 %v537
    %564 = vmatprep.subr.mxu0 0.0
    %565 = vmatpush1.msra.mxu0 %v536
    %566 = vmatprep.subr.mxu0 0.0
    %567 = vmatpush1.msra.mxu0 %v535
    %568 = vmatprep.subr.mxu0 0.0
    %569 = vmatpush1.msra.mxu0 %v534
    %570 = vmatprep.subr.mxu0 0.0
    %571 = vmatpush2.msra.mxu0 0.0
    %572 = vmatprep.subr.mxu0 0.0
    %573 = vmatpush2.msra.mxu0 0.0
    %574 = vmatprep.subr.mxu0 0.0
    %575 = vmatpush2.msra.mxu0 0.0
    %576 = vmatprep.subr.mxu0 0.0
    %577 = vmatpush2.msra.mxu0 0.0
    %578 = vmatprep.subr.mxu0 0.0
    %579 = vmatpush2.msra.mxu0 0.0
    %580 = vmatprep.subr.mxu0 0.0
    %581 = vmatpush2.msra.mxu0 0.0
    %582 = vmatprep.subr.mxu0 0.0
    %583 = vmatpush2.msra.mxu0 0.0
    %584 = vmatprep.subr.mxu0 0.0
    %585 = vmatpush2.msra.mxu0 0.0
    %586 = vmatprep.subr.mxu0 0.0
    %587 = vmatpush2.msra.mxu0 0.0
    %588 = vmatprep.subr.mxu0 0.0
    %589 = vmatpush2.msra.mxu0 0.0
    %590 = vmatprep.subr.mxu0 0.0
    %591 = vmatpush2.msra.mxu0 0.0
    %592 = vmatprep.subr.mxu0 0.0
    %593 = vmatpush2.msra.mxu0 0.0
    %594 = vmatprep.subr.mxu0 0.0
    %595 = vmatpush2.msra.mxu0 0.0
    %596 = vmatprep.subr.mxu0 0.0
    %597 = vmatpush2.msra.mxu0 0.0
    %598 = vmatprep.subr.mxu0 0.0
    %599 = vmatpush2.msra.mxu0 0.0
    %600 = vmatprep.subr.mxu0 0.0
    %601 = vmatpush2.msra.mxu0 0.0
    %602 = vmatprep.mubr.f32.mxu0 0.0
    %603 = vmatmul.mubr.f32.gmra.mxu0 %v37
    %v604 = vpop.f32.mrf.mxu0
    %v605 = vadd.f32 0.0, %v604
    %v606 = vpop.f32.mrf.mxu0
    %607 = vmatprep.mubr.f32.mxu0 0.0
    %608 = vmatmul.mubr.f32.gmra.mxu0 %v40
    %v609 = vpop.f32.mrf.mxu0
    %v610 = vadd.f32 0.0, %v609
    %v611 = vpop.f32.mrf.mxu0
    %612 = vmatprep.mubr.f32.mxu0 0.0
    %613 = vmatmul.mubr.f32.gmra.mxu0 %v43
    %v614 = vpop.f32.mrf.mxu0
    %v615 = vadd.f32 0.0, %v614
    %v616 = vpop.f32.mrf.mxu0
    %617 = vmatprep.mubr.f32.mxu0 0.0
    %618 = vmatmul.mubr.f32.gmra.mxu0 %v46
    %v619 = vpop.f32.mrf.mxu0
    %v620 = vadd.f32 0.0, %v619
    %v621 = vpop.f32.mrf.mxu0
    %622 = vmatprep.mubr.f32.mxu0 0.0
    %623 = vmatmul.mubr.f32.gmra.mxu0 %v49
    %v624 = vpop.f32.mrf.mxu0
    %v625 = vadd.f32 0.0, %v624
    %v626 = vpop.f32.mrf.mxu0
    %627 = vmatprep.mubr.f32.mxu0 0.0
    %628 = vmatmul.mubr.f32.gmra.mxu0 %v52
    %v629 = vpop.f32.mrf.mxu0
    %v630 = vadd.f32 0.0, %v629
    %v631 = vpop.f32.mrf.mxu0
    %632 = vmatprep.mubr.f32.mxu0 0.0
    %633 = vmatmul.mubr.f32.gmra.mxu0 %v55
    %v634 = vpop.f32.mrf.mxu0
    %v635 = vadd.f32 0.0, %v634
    %v636 = vpop.f32.mrf.mxu0
    %637 = vmatprep.mubr.f32.mxu0 0.0
    %638 = vmatmul.mubr.f32.gmra.mxu0 %v58
    %v639 = vpop.f32.mrf.mxu0
    %v640 = vadd.f32 0.0, %v639
    %v641 = vpop.f32.mrf.mxu0
    %642 = vmatprep.mubr.f32.mxu0 0.0
    %643 = vmatmul.mubr.f32.gmra.mxu0 %v61
    %v644 = vpop.f32.mrf.mxu0
    %v645 = vadd.f32 0.0, %v644
    %v646 = vpop.f32.mrf.mxu0
    %647 = vmatprep.mubr.f32.mxu0 0.0
    %648 = vmatmul.mubr.f32.gmra.mxu0 %v64
    %v649 = vpop.f32.mrf.mxu0
    %v650 = vadd.f32 0.0, %v649
    %v651 = vpop.f32.mrf.mxu0
    %652 = vmatprep.mubr.f32.mxu0 0.0
    %653 = vmatmul.mubr.f32.gmra.mxu0 %v67
    %v654 = vpop.f32.mrf.mxu0
    %v655 = vadd.f32 0.0, %v654
    %v656 = vpop.f32.mrf.mxu0
    %657 = vmatprep.mubr.f32.mxu0 0.0
    %658 = vmatmul.mubr.f32.gmra.mxu0 %v70
    %v659 = vpop.f32.mrf.mxu0
    %v660 = vadd.f32 0.0, %v659
    %v661 = vpop.f32.mrf.mxu0
    %662 = vmatprep.mubr.f32.mxu0 0.0
    %663 = vmatmul.mubr.f32.gmra.mxu0 %v73
    %v664 = vpop.f32.mrf.mxu0
    %v665 = vadd.f32 0.0, %v664
    %v666 = vpop.f32.mrf.mxu0
    %667 = vmatprep.mubr.f32.mxu0 0.0
    %668 = vmatmul.mubr.f32.gmra.mxu0 %v76
    %v669 = vpop.f32.mrf.mxu0
    %v670 = vadd.f32 0.0, %v669
    %v671 = vpop.f32.mrf.mxu0
    %672 = vmatprep.mubr.f32.mxu0 0.0
    %673 = vmatmul.mubr.f32.gmra.mxu0 %v79
    %v674 = vpop.f32.mrf.mxu0
    %v675 = vadd.f32 0.0, %v674
    %v676 = vpop.f32.mrf.mxu0
    %677 = vmatprep.mubr.f32.mxu0 0.0
    %678 = vmatmul.mubr.f32.gmra.mxu0 %v82
    %v679 = vpop.f32.mrf.mxu0
    %v680 = vadd.f32 0.0, %v679
    %v681 = vpop.f32.mrf.mxu0
    %682 = vdwg.mxu0
    %683 = vmatprep.subr.mxu0 0.0
    %684 = vmatpush1.msra.mxu0 %v680
    %685 = vmatprep.subr.mxu0 0.0
    %686 = vmatpush1.msra.mxu0 %v675
    %687 = vmatprep.subr.mxu0 0.0
    %688 = vmatpush1.msra.mxu0 %v670
    %689 = vmatprep.subr.mxu0 0.0
    %690 = vmatpush1.msra.mxu0 %v665
    %691 = vmatprep.subr.mxu0 0.0
    %692 = vmatpush1.msra.mxu0 %v660
    %693 = vmatprep.subr.mxu0 0.0
    %694 = vmatpush1.msra.mxu0 %v655
    %695 = vmatprep.subr.mxu0 0.0
    %696 = vmatpush1.msra.mxu0 %v650
    %697 = vmatprep.subr.mxu0 0.0
    %698 = vmatpush1.msra.mxu0 %v645
    %699 = vmatprep.subr.mxu0 0.0
    %700 = vmatpush1.msra.mxu0 %v640
    %701 = vmatprep.subr.mxu0 0.0
    %702 = vmatpush1.msra.mxu0 %v635
    %703 = vmatprep.subr.mxu0 0.0
    %704 = vmatpush1.msra.mxu0 %v630
    %705 = vmatprep.subr.mxu0 0.0
    %706 = vmatpush1.msra.mxu0 %v625
    %707 = vmatprep.subr.mxu0 0.0
    %708 = vmatpush1.msra.mxu0 %v620
    %709 = vmatprep.subr.mxu0 0.0
    %710 = vmatpush1.msra.mxu0 %v615
    %711 = vmatprep.subr.mxu0 0.0
    %712 = vmatpush1.msra.mxu0 %v610
    %713 = vmatprep.subr.mxu0 0.0
    %714 = vmatpush1.msra.mxu0 %v605
    %715 = vmatprep.subr.mxu0 0.0
    %716 = vmatpush2.msra.mxu0 0.0
    %717 = vmatprep.subr.mxu0 0.0
    %718 = vmatpush2.msra.mxu0 0.0
    %719 = vmatprep.subr.mxu0 0.0
    %720 = vmatpush2.msra.mxu0 0.0
    %721 = vmatprep.subr.mxu0 0.0
    %722 = vmatpush2.msra.mxu0 0.0
    %723 = vmatprep.subr.mxu0 0.0
    %724 = vmatpush2.msra.mxu0 0.0
    %725 = vmatprep.subr.mxu0 0.0
    %726 = vmatpush2.msra.mxu0 0.0
    %727 = vmatprep.subr.mxu0 0.0
    %728 = vmatpush2.msra.mxu0 0.0
    %729 = vmatprep.subr.mxu0 0.0
    %730 = vmatpush2.msra.mxu0 0.0
    %731 = vmatprep.subr.mxu0 0.0
    %732 = vmatpush2.msra.mxu0 0.0
    %733 = vmatprep.subr.mxu0 0.0
    %734 = vmatpush2.msra.mxu0 0.0
    %735 = vmatprep.subr.mxu0 0.0
    %736 = vmatpush2.msra.mxu0 0.0
    %737 = vmatprep.subr.mxu0 0.0
    %738 = vmatpush2.msra.mxu0 0.0
    %739 = vmatprep.subr.mxu0 0.0
    %740 = vmatpush2.msra.mxu0 0.0
    %741 = vmatprep.subr.mxu0 0.0
    %742 = vmatpush2.msra.mxu0 0.0
    %743 = vmatprep.subr.mxu0 0.0
    %744 = vmatpush2.msra.mxu0 0.0
    %745 = vmatprep.subr.mxu0 0.0
    %746 = vmatpush2.msra.mxu0 0.0
    %747 = vmatprep.mubr.f32.mxu0 0.0
    %748 = vmatmul.mubr.f32.gmra.mxu0 %v471
    %v749 = vpop.f32.mrf.mxu0
    %v750 = vadd.f32 0.0, %v749
    %v751 = vpop.f32.mrf.mxu0
    %752 = vmatprep.mubr.f32.mxu0 0.0
    %753 = vmatmul.mubr.f32.gmra.mxu0 %v473
    %v754 = vpop.f32.mrf.mxu0
    %v755 = vadd.f32 0.0, %v754
    %v756 = vpop.f32.mrf.mxu0
    %757 = vmatprep.mubr.f32.mxu0 0.0
    %758 = vmatmul.mubr.f32.gmra.mxu0 %v475
    %v759 = vpop.f32.mrf.mxu0
    %v760 = vadd.f32 0.0, %v759
    %v761 = vpop.f32.mrf.mxu0
    %762 = vmatprep.mubr.f32.mxu0 0.0
    %763 = vmatmul.mubr.f32.gmra.mxu0 %v477
    %v764 = vpop.f32.mrf.mxu0
    %v765 = vadd.f32 0.0, %v764
    %v766 = vpop.f32.mrf.mxu0
    %767 = vmatprep.mubr.f32.mxu0 0.0
    %768 = vmatmul.mubr.f32.gmra.mxu0 %v479
    %v769 = vpop.f32.mrf.mxu0
    %v770 = vadd.f32 0.0, %v769
    %v771 = vpop.f32.mrf.mxu0
    %772 = vmatprep.mubr.f32.mxu0 0.0
    %773 = vmatmul.mubr.f32.gmra.mxu0 %v481
    %v774 = vpop.f32.mrf.mxu0
    %v775 = vadd.f32 0.0, %v774
    %v776 = vpop.f32.mrf.mxu0
    %777 = vmatprep.mubr.f32.mxu0 0.0
    %778 = vmatmul.mubr.f32.gmra.mxu0 %v483
    %v779 = vpop.f32.mrf.mxu0
    %v780 = vadd.f32 0.0, %v779
    %v781 = vpop.f32.mrf.mxu0
    %782 = vmatprep.mubr.f32.mxu0 0.0
    %783 = vmatmul.mubr.f32.gmra.mxu0 %v485
    %v784 = vpop.f32.mrf.mxu0
    %v785 = vadd.f32 0.0, %v784
    %v786 = vpop.f32.mrf.mxu0
    %787 = vmatprep.mubr.f32.mxu0 0.0
    %788 = vmatmul.mubr.f32.gmra.mxu0 %v487
    %v789 = vpop.f32.mrf.mxu0
    %v790 = vadd.f32 0.0, %v789
    %v791 = vpop.f32.mrf.mxu0
    %792 = vmatprep.mubr.f32.mxu0 0.0
    %793 = vmatmul.mubr.f32.gmra.mxu0 %v489
    %v794 = vpop.f32.mrf.mxu0
    %v795 = vadd.f32 0.0, %v794
    %v796 = vpop.f32.mrf.mxu0
    %797 = vmatprep.mubr.f32.mxu0 0.0
    %798 = vmatmul.mubr.f32.gmra.mxu0 %v491
    %v799 = vpop.f32.mrf.mxu0
    %v800 = vadd.f32 0.0, %v799
    %v801 = vpop.f32.mrf.mxu0
    %802 = vmatprep.mubr.f32.mxu0 0.0
    %803 = vmatmul.mubr.f32.gmra.mxu0 %v493
    %v804 = vpop.f32.mrf.mxu0
    %v805 = vadd.f32 0.0, %v804
    %v806 = vpop.f32.mrf.mxu0
    %807 = vmatprep.mubr.f32.mxu0 0.0
    %808 = vmatmul.mubr.f32.gmra.mxu0 %v495
    %v809 = vpop.f32.mrf.mxu0
    %v810 = vadd.f32 0.0, %v809
    %v811 = vpop.f32.mrf.mxu0
    %812 = vmatprep.mubr.f32.mxu0 0.0
    %813 = vmatmul.mubr.f32.gmra.mxu0 %v497
    %v814 = vpop.f32.mrf.mxu0
    %v815 = vadd.f32 0.0, %v814
    %v816 = vpop.f32.mrf.mxu0
    %817 = vmatprep.mubr.f32.mxu0 0.0
    %818 = vmatmul.mubr.f32.gmra.mxu0 %v499
    %v819 = vpop.f32.mrf.mxu0
    %v820 = vadd.f32 0.0, %v819
    %v821 = vpop.f32.mrf.mxu0
    %822 = vmatprep.mubr.f32.mxu0 0.0
    %823 = vmatmul.mubr.f32.gmra.mxu0 %v501
    %v824 = vpop.f32.mrf.mxu0
    %v825 = vadd.f32 0.0, %v824
    %v826 = vpop.f32.mrf.mxu0
    %827 = vdwg.mxu0
    %v828 = vrcp.pop %v503
    %v829 = vmul.f32 1.0, %v828
    %v830 = vrcp.pop %v505
    %v831 = vmul.f32 1.0, %v830
    %v832 = vrcp.pop %v507
    %v833 = vmul.f32 1.0, %v832
    %v834 = vrcp.pop %v509
    %v835 = vmul.f32 1.0, %v834
    %v836 = vrcp.pop %v511
    %v837 = vmul.f32 1.0, %v836
    %v838 = vrcp.pop %v513
    %v839 = vmul.f32 1.0, %v838
    %v840 = vrcp.pop %v515
    %v841 = vmul.f32 1.0, %v840
    %v842 = vrcp.pop %v517
    %v843 = vmul.f32 1.0, %v842
    %v844 = vrcp.pop %v519
    %v845 = vmul.f32 1.0, %v844
    %v846 = vrcp.pop %v521
    %v847 = vmul.f32 1.0, %v846
    %v848 = vrcp.pop %v523
    %v849 = vmul.f32 1.0, %v848
    %v850 = vrcp.pop %v525
    %v851 = vmul.f32 1.0, %v850
    %v852 = vrcp.pop %v527
    %v853 = vmul.f32 1.0, %v852
    %v854 = vrcp.pop %v529
    %v855 = vmul.f32 1.0, %v854
    %v856 = vrcp.pop %v531
    %v857 = vmul.f32 1.0, %v856
    %v858 = vrcp.pop %v533
    %v859 = vmul.f32 1.0, %v858
    %v860 = vmul.f32 %v750, %v829
    %v861 = vmul.f32 %v755, %v831
    %v862 = vmul.f32 %v760, %v833
    %v863 = vmul.f32 %v765, %v835
    %v864 = vmul.f32 %v770, %v837
    %v865 = vmul.f32 %v775, %v839
    %v866 = vmul.f32 %v780, %v841
    %v867 = vmul.f32 %v785, %v843
    %v868 = vmul.f32 %v790, %v845
    %v869 = vmul.f32 %v795, %v847
    %v870 = vmul.f32 %v800, %v849
    %v871 = vmul.f32 %v805, %v851
    %v872 = vmul.f32 %v810, %v853
    %v873 = vmul.f32 %v815, %v855
    %v874 = vmul.f32 %v820, %v857
    %v875 = vmul.f32 %v825, %v859
    %876 = vst [vmem:[#allocation2] sm:$0xff] %v860
    %877 = vst [vmem:[#allocation2 + $0x8] sm:$0xff] %v861
    %878 = vst [vmem:[#allocation2 + $0x10] sm:$0xff] %v862
    %879 = vst [vmem:[#allocation2 + $0x18] sm:$0xff] %v863
    %880 = vst [vmem:[#allocation2 + $0x20] sm:$0xff] %v864
    %881 = vst [vmem:[#allocation2 + $0x28] sm:$0xff] %v865
    %882 = vst [vmem:[#allocation2 + $0x30] sm:$0xff] %v866
    %883 = vst [vmem:[#allocation2 + $0x38] sm:$0xff] %v867
    %884 = vst [vmem:[#allocation2 + $0x40] sm:$0xff] %v868
    %885 = vst [vmem:[#allocation2 + $0x48] sm:$0xff] %v869
    %886 = vst [vmem:[#allocation2 + $0x50] sm:$0xff] %v870
    %887 = vst [vmem:[#allocation2 + $0x58] sm:$0xff] %v871
    %888 = vst [vmem:[#allocation2 + $0x60] sm:$0xff] %v872
    %889 = vst [vmem:[#allocation2 + $0x68] sm:$0xff] %v873
    %890 = vst [vmem:[#allocation2 + $0x70] sm:$0xff] %v874
    %891 = vst [vmem:[#allocation2 + $0x78] sm:$0xff] %v875
    // Predicated region
    $region14: #{tpu_custom_call.1} parent=1 // pred_check
      _
    $region15: #{tpu_custom_call.1} parent=1 // pred_check_branch
      %893 = sbr.rel (0) target = $region17
    $region16: #{tpu_custom_call.1} parent=1 // pred_region
      %s895 = ssub.s32 2048, 2048
      %896 = vsyncadd [#allocation3], %s895
      %s897 = sshll.u32 [#allocation2], 4
      %s898 = int_to_ptr.vmem [resolvable:$true] %s897
      %903 = dma.vmem_to_hbm [thread:$0]  %s898, 2048, %s3, [#allocation3], 128, 128, 8
    $region17: #{tpu_custom_call.1} parent=1 // pred_fallthru
      _
    // Predicated region
    $region18: #{tpu_custom_call.1} parent=1 // pred_check
      _
    $region19: #{tpu_custom_call.1} parent=1 // pred_check_branch
      %905 = sbr.rel (0) target = $region21
    $region20: #{tpu_custom_call.1} parent=1 // pred_region
      %906 = dma.done [#allocation3], 2048
    $region21: #{tpu_custom_call.1} parent=1 // pred_fallthru
      _
    %907 = vsyncpa [#allocation3], 1

</llo_original>
